<compile_context>
chip_gen: v7x
topology: tpu7x:2x2x1
jax: 0.10.0
libtpu: 0.0.40
codegen_flags: <defaults>
</compile_context>

<pallas_src>
import math
import jax
import jax.numpy as jnp
from jax.experimental import pallas as pl
from jax.experimental.pallas import tpu as pltpu


_INV_SQRT2 = 0.7071067811865476
_SQRT_2_OVER_PI = 0.7978845608028654


def _make_mlp_kernel(compute_dtype, approximate_gelu, write_hidden,
                     hidden_is_compute_dtype):
    def kernel(x_ref, w1_ref, b1_ref, w2_ref, b2_ref, out_ref, *rest):
        # x_ref:  (tm, d_model)        w1_ref: (d_model, tf) bf16   b1_ref: (1, tf) f32
        # w2_ref: (tf, d_model) bf16   b2_ref: (1, d_model)  f32
        # out_ref:(tm, d_model)        [hid_ref:(tm, tf)]           acc_ref:(tm, d_model) f32
        if write_hidden:
            hid_ref, acc_ref = rest
        else:
            (acc_ref,) = rest

        j = pl.program_id(1)

        @pl.when(j == 0)
        def _():
            acc_ref[...] = jnp.zeros_like(acc_ref)

        # x tile is resident across j (index_map (i, 0)); cast to bf16 in-kernel so
        # the wrapper never materializes a bf16 copy of x in HBM.
        x_c = x_ref[...].astype(compute_dtype)

        # fc1 tile: MXU matmul (bf16 operands, f32 accumulate); bias + GELU in f32.
        h = jnp.dot(x_c, w1_ref[...], preferred_element_type=jnp.float32)
        h = h + b1_ref[...]

        if approximate_gelu:
            # tanh approximation: transcendental lands on the (otherwise idle) EUP slot.
            h = 0.5 * h * (1.0 + jnp.tanh(_SQRT_2_OVER_PI * (h + 0.044715 * h * h * h)))
        else:
            # exact erf form, matching torch.nn.functional.gelu's default.
            h = 0.5 * h * (1.0 + jax.lax.erf(h * _INV_SQRT2))

        # Single f32 -> bf16 pack of h, reused by both the hidden write and fc2.
        h_c = h.astype(compute_dtype)

        if write_hidden:
            # mirrors `self.hidden_states = x.detach().clone()` (post-GELU, pre-dropout)
            hid_ref[...] = h_c if hidden_is_compute_dtype else h.astype(hid_ref.dtype)

        # dropout: eval-mode identity
        # TODO(synk): training-mode dropout (pltpu.prng_random_bits mask) not wired in.

        # fc2 partial product over this d_ff tile, accumulated in f32 VMEM scratch.
        acc_ref[...] += jnp.dot(h_c, w2_ref[...], preferred_element_type=jnp.float32)

        @pl.when(j == pl.num_programs(1) - 1)
        def _():
            out_ref[...] = (acc_ref[...] + b2_ref[...]).astype(out_ref.dtype)

    return kernel


def _round_up(a, m):
    return -(-a // m) * m


def _vmem_capacity_bytes():
    """Per-TensorCore VMEM capacity (generation-aware), conservative fallback."""
    try:
        cap = int(pltpu.get_tpu_info().vmem_capacity_bytes)
        if cap > 0:
            return cap
    except Exception:
        pass
    return 64 << 20  # v7x per-TC size: safe lower bound for all generations


def _select_tiles(N, d_model, d_ff, x_bytes, out_bytes, hid_bytes, budget):
    """Pick (tm, tf): tf bounded so double-buffered bf16 weight tiles fit ~40% of
    the budget; tm as large as fits (feeds the MXU / amortizes the weight stream)
    while keeping >= 2 row tiles so the parallel axis can shard across v7x TCs."""
    # --- d_ff tile: 2 weights * 2 buffers * d_model * tf * 2 B <= 0.4 * budget
    tf_cap = int(0.4 * budget) // (8 * d_model)
    tf_cap = max(128, (tf_cap // 128) * 128)
    if d_ff <= tf_cap:
        tf = d_ff
    else:
        tf = None
        c = tf_cap
        while c >= 128:
            if d_ff % c == 0:
                tf = c
                break
            c -= 128
        if tf is None:
            # TODO(synk): pad d_ff for awkward widths; fall back to full d_ff.
            tf = d_ff

    def step_bytes(tm_):
        w = 2 * d_model * tf * 2 * 2            # w1 + w2 tiles, bf16, double-buffered
        xin = tm_ * d_model * x_bytes * 2       # x tile, double-buffered
        out = tm_ * d_model * out_bytes * 2     # out tile, double-buffered
        hid = tm_ * tf * hid_bytes * 2          # hidden tile (0 if disabled)
        acc = tm_ * d_model * 4                 # f32 accumulator scratch
        bias = (tf + d_model) * 4 * 2
        return w + xin + out + hid + acc + bias

    # >= 2 row tiles when there is more than one tile's worth of rows.
    if N > 8:
        tm_cap = max(8, _round_up(-(-N // 2), 8))
    else:
        tm_cap = _round_up(max(N, 1), 8)

    tm = 8
    for cand in (1024, 768, 512, 384, 256, 128, 64, 32, 16, 8):
        if cand <= tm_cap and step_bytes(cand) <= budget:
            tm = cand
            break
    return min(tm, tm_cap), tf


def prepare_mlp_params(w1, b1, w2, b2, compute_dtype=jnp.bfloat16):
    """One-time parameter prep: hold weights persistently in the MXU compute dtype
    (no per-call HBM cast pass) and biases in f32."""
    return (jnp.asarray(w1, compute_dtype), jnp.asarray(b1, jnp.float32),
            jnp.asarray(w2, compute_dtype), jnp.asarray(b2, jnp.float32))


def mlp_forward(x, w1, b1, w2, b2, *, tm=None, tf=None,
                compute_dtype=jnp.bfloat16, return_hidden=True, hidden_dtype=None,
                approximate_gelu=False, vmem_limit_bytes=None):
    """MLP forward.

    x : [..., d_model]            (leading dims flattened into N tokens)
    w1: [d_model, d_ff], b1: [d_ff]
    w2: [d_ff, d_model], b2: [d_model]
    Returns out [..., d_model] (and hidden [..., d_ff] if return_hidden).
    """
    orig_shape = x.shape
    d_model = orig_shape[-1]
    x2d = x.reshape(-1, d_model)
    N = x2d.shape[0]
    d_ff = w1.shape[1]
    assert w1.shape == (d_model, d_ff) and w2.shape == (d_ff, d_model)

    out_dtype = x.dtype
    if hidden_dtype is None:
        hidden_dtype = x.dtype  # torch clones the activation dtype

    # Prefer prepare_mlp_params() so this per-call HBM cast pass never runs.
    if w1.dtype != jnp.dtype(compute_dtype):
        w1 = w1.astype(compute_dtype)
    if w2.dtype != jnp.dtype(compute_dtype):
        w2 = w2.astype(compute_dtype)
    b1c = jnp.asarray(b1, jnp.float32).reshape(1, d_ff)
    b2c = jnp.asarray(b2, jnp.float32).reshape(1, d_model)

    vmem_cap = _vmem_capacity_bytes()
    budget = int(0.75 * vmem_cap)
    if vmem_limit_bytes is None:
        vmem_limit_bytes = int(0.85 * vmem_cap)

    x_bytes = jnp.dtype(x.dtype).itemsize
    out_bytes = jnp.dtype(out_dtype).itemsize
    hid_bytes = jnp.dtype(hidden_dtype).itemsize if return_hidden else 0

    auto_tm, auto_tf = _select_tiles(N, d_model, d_ff, x_bytes, out_bytes,
                                     hid_bytes, budget)
    if tm is None:
        tm = auto_tm
    if tf is None:
        tf = auto_tf
    assert d_ff % tf == 0, "d_ff must be a multiple of the d_ff tile tf"

    # Pad the token dim to a multiple of tm (sublane-aligned, lane-dense stores).
    N_pad = _round_up(max(N, 1), tm)
    if N_pad != N:
        x2d = jnp.pad(x2d, ((0, N_pad - N), (0, 0)))

    grid = (N_pad // tm, d_ff // tf)

    in_specs = [
        pl.BlockSpec((tm, d_model), lambda i, j: (i, 0)),   # x row tile (resident over j)
        pl.BlockSpec((d_model, tf), lambda i, j: (0, j)),   # w1 d_ff tile
        pl.BlockSpec((1, tf), lambda i, j: (0, j)),         # b1 tile
        pl.BlockSpec((tf, d_model), lambda i, j: (j, 0)),   # w2 d_ff tile
        pl.BlockSpec((1, d_model), lambda i, j: (0, 0)),    # b2
    ]
    out_spec_main = pl.BlockSpec((tm, d_model), lambda i, j: (i, 0))  # revisited over j
    if return_hidden:
        out_specs = [out_spec_main, pl.BlockSpec((tm, tf), lambda i, j: (i, j))]
        out_shape = (jax.ShapeDtypeStruct((N_pad, d_model), out_dtype),
                     jax.ShapeDtypeStruct((N_pad, d_ff), hidden_dtype))
    else:
        out_specs = out_spec_main
        out_shape = jax.ShapeDtypeStruct((N_pad, d_model), out_dtype)

    kernel = _make_mlp_kernel(
        compute_dtype, approximate_gelu, return_hidden,
        jnp.dtype(hidden_dtype) == jnp.dtype(compute_dtype))

    results = pl.pallas_call(
        kernel,
        out_shape=out_shape,
        grid_spec=pltpu.PrefetchScalarGridSpec(
            num_scalar_prefetch=0,
            grid=grid,
            in_specs=in_specs,
            out_specs=out_specs,
            scratch_shapes=[pltpu.VMEM((tm, d_model), jnp.float32)],  # fc2 accumulator
        ),
        compiler_params=pltpu.CompilerParams(
            dimension_semantics=("parallel", "arbitrary"),
            vmem_limit_bytes=vmem_limit_bytes,
        ),
    )(x2d, w1, b1c, w2, b2c)

    if return_hidden:
        out2d, hid2d = results
        out = out2d[:N].reshape(orig_shape)
        hidden = hid2d[:N].reshape(orig_shape[:-1] + (d_ff,))
        return out, hidden
    out2d = results
    return out2d[:N].reshape(orig_shape)


if __name__ == "__main__":
    # Small but lane-dense shapes: batch=2, seq=8 -> N=16 tokens, d_model=128, d_ff=512.
    batch, seq, d_model, d_ff = 2, 8, 128, 512
    key = jax.random.PRNGKey(0)
    kx, kw1, kb1, kw2, kb2 = jax.random.split(key, 5)

    x = jax.random.normal(kx, (batch, seq, d_model), dtype=jnp.float32)

    # Deterministic parameter init (torch Linear-style uniform bounds).
    bound1 = 1.0 / math.sqrt(d_model)
    bound2 = 1.0 / math.sqrt(d_ff)
    w1 = jax.random.uniform(kw1, (d_model, d_ff), jnp.float32, -bound1, bound1)
    b1 = jax.random.uniform(kb1, (d_ff,), jnp.float32, -bound1, bound1)
    w2 = jax.random.uniform(kw2, (d_ff, d_model), jnp.float32, -bound2, bound2)
    b2 = jax.random.uniform(kb2, (d_model,), jnp.float32, -bound2, bound2)

    # One-time prep: weights held persistently in bf16 (no per-call cast pass).
    w1b, b1p, w2b, b2p = prepare_mlp_params(w1, b1, w2, b2)

    # tf=256 (< d_ff) exercises the d_ff-tiled accumulation path (2 reduction steps);
    # tm is auto-selected (>= 2 row tiles so the parallel axis can megacore-shard).
    out, hidden = mlp_forward(x, w1b, b1p, w2b, b2p, tf=256)
    jax.block_until_ready(out)
    jax.block_until_ready(hidden)

    x2d = x.reshape(batch * seq, d_model)
    out2d = out.reshape(batch * seq, d_model)
    hid2d = hidden.reshape(batch * seq, d_ff)

    # Matched reference: same bf16 operand rounding, f32 accumulate (tight check).
    xb = x2d.astype(jnp.bfloat16).astype(jnp.float32)
    w1f = w1b.astype(jnp.float32)
    w2f = w2b.astype(jnp.float32)
    h_ref = jax.nn.gelu(xb @ w1f + b1, approximate=False)
    out_ref = h_ref.astype(jnp.bfloat16).astype(jnp.float32) @ w2f + b2
    assert jnp.allclose(out2d, out_ref, atol=1e-2, rtol=1e-2)
    assert jnp.allclose(hid2d, h_ref, atol=1e-2, rtol=1e-2)

    # Hidden-output-disabled path.
    out_only = mlp_forward(x, w1b, b1p, w2b, b2p, tf=256, return_hidden=False)
    jax.block_until_ready(out_only)
    assert jnp.allclose(out_only.reshape(-1, d_model), out_ref, atol=1e-2, rtol=1e-2)

    # Non-aligned token count exercises the padding path (N=10 -> padded to 16).
    x_odd = x[:, :5, :]
    out_odd, hid_odd = mlp_forward(x_odd, w1b, b1p, w2b, b2p, tf=256)
    jax.block_until_ready(out_odd)
    n_odd = batch * 5
    assert jnp.allclose(out_odd.reshape(n_odd, d_model),
                        out_ref.reshape(batch, seq, d_model)[:, :5, :].reshape(n_odd, d_model),
                        atol=1e-2, rtol=1e-2)

    # Loose sanity check against the pure-f32 torch-semantics reference.
    h_f32 = jax.nn.gelu(x2d @ w1 + b1, approximate=False)
    out_f32 = h_f32 @ w2 + b2
    assert jnp.allclose(out2d, out_f32, atol=1e-1, rtol=1e-1)

    print("KERNEL_OK")
</pallas_src>

<mosaic_0001>
module attributes {stable_mosaic.version = 11 : i64} {
  func.func @kernel(%arg0: i32, %arg1: i32, %arg2: memref<8x128xf32, #tpu.memory_space<vmem>>, %arg3: memref<128x256xbf16, #tpu.memory_space<vmem>>, %arg4: memref<1x256xf32, #tpu.memory_space<vmem>>, %arg5: memref<256x128xbf16, #tpu.memory_space<vmem>>, %arg6: memref<1x128xf32, #tpu.memory_space<vmem>>, %arg7: memref<8x128xf32, #tpu.memory_space<vmem>>, %arg8: memref<8x256xf32, #tpu.memory_space<vmem>>, %arg9: memref<8x128xf32, #tpu.memory_space<vmem>>) attributes {dimension_semantics = [#tpu.dimension_semantics<parallel>, #tpu.dimension_semantics<arbitrary>], iteration_bounds = array<i64: 2, 2>, scalar_prefetch = 0 : i64, scratch_operands = 1 : i64, tpu.core_type = #tpu.core_type<tc>, window_params = [{transform_indices = @transform_0, window_bounds = array<i64: 8, 128>}, {transform_indices = @transform_1, window_bounds = array<i64: 128, 256>}, {transform_indices = @transform_2, window_bounds = array<i64: 1, 256>}, {transform_indices = @transform_3, window_bounds = array<i64: 256, 128>}, {pipeline_mode = #tpu.pipeline_mode<synchronous>, transform_indices = @transform_4, window_bounds = array<i64: 1, 128>}, {transform_indices = @transform_5, window_bounds = array<i64: 8, 128>}, {transform_indices = @transform_6, window_bounds = array<i64: 8, 256>}]} {
    %c0_i32 = arith.constant 0 : i32
    %0 = arith.cmpi eq, %arg1, %c0_i32 : i32
    %1 = arith.extui %0 : i1 to i32
    %c0_i32_0 = arith.constant 0 : i32
    %2 = arith.cmpi ne, %1, %c0_i32_0 : i32
    scf.if %2 {
      %cst_19 = arith.constant 0.000000e+00 : f32
      %28 = vector.broadcast %cst_19 : f32 to vector<8x128xf32>
      %c0_20 = arith.constant 0 : index
      %c0_21 = arith.constant 0 : index
      %29 = vector.load %arg9[%c0_20, %c0_21] : memref<8x128xf32, #tpu.memory_space<vmem>>, vector<8x128xf32>
      tpu.vector_store %arg9[%c0_20, %c0_21], %28 {strides = array<i32>} : memref<8x128xf32, #tpu.memory_space<vmem>>, vector<8x128xf32>,
    } else {
    }
    %c0 = arith.constant 0 : index
    %c0_1 = arith.constant 0 : index
    %3 = vector.load %arg2[%c0, %c0_1] : memref<8x128xf32, #tpu.memory_space<vmem>>, vector<8x128xf32>
    %4 = arith.truncf %3 : vector<8x128xf32> to vector<8x128xbf16>
    %c0_2 = arith.constant 0 : index
    %c0_3 = arith.constant 0 : index
    %5 = vector.load %arg3[%c0_2, %c0_3] : memref<128x256xbf16, #tpu.memory_space<vmem>>, vector<128x256xbf16>
    %cst = arith.constant dense<0.000000e+00> : vector<8x256xf32>
    %6 = tpu.matmul %4, %5, %cst {dimension_numbers = #tpu.dot_dimension_numbers<[1], [0], [0], [1], [0, 0, 1, 1], [], []>} : vector<8x128xbf16>, vector<128x256xbf16>, vector<8x256xf32> -> vector<8x256xf32>
    %c0_4 = arith.constant 0 : index
    %c0_5 = arith.constant 0 : index
    %7 = vector.load %arg4[%c0_4, %c0_5] : memref<1x256xf32, #tpu.memory_space<vmem>>, vector<1x256xf32>
    %8 = vector.broadcast %7 : vector<1x256xf32> to vector<8x256xf32>
    %9 = arith.addf %6, %8 : vector<8x256xf32>
    %cst_6 = arith.constant 5.000000e-01 : f32
    %10 = vector.broadcast %cst_6 : f32 to vector<8x256xf32>
    %11 = arith.mulf %10, %9 : vector<8x256xf32>
    %cst_7 = arith.constant 0.707106769 : f32
    %12 = vector.broadcast %cst_7 : f32 to vector<8x256xf32>
    %13 = arith.mulf %9, %12 : vector<8x256xf32>
    %14 = math.erf %13 : vector<8x256xf32>
    %cst_8 = arith.constant 1.000000e+00 : f32
    %15 = vector.broadcast %cst_8 : f32 to vector<8x256xf32>
    %16 = arith.addf %15, %14 : vector<8x256xf32>
    %17 = arith.mulf %11, %16 : vector<8x256xf32>
    %18 = arith.truncf %17 : vector<8x256xf32> to vector<8x256xbf16>
    %c0_9 = arith.constant 0 : index
    %c0_10 = arith.constant 0 : index
    %19 = vector.load %arg8[%c0_9, %c0_10] : memref<8x256xf32, #tpu.memory_space<vmem>>, vector<8x256xf32>
    tpu.vector_store %arg8[%c0_9, %c0_10], %17 {strides = array<i32>} : memref<8x256xf32, #tpu.memory_space<vmem>>, vector<8x256xf32>,
    %c0_11 = arith.constant 0 : index
    %c0_12 = arith.constant 0 : index
    %20 = vector.load %arg9[%c0_11, %c0_12] : memref<8x128xf32, #tpu.memory_space<vmem>>, vector<8x128xf32>
    %c0_13 = arith.constant 0 : index
    %c0_14 = arith.constant 0 : index
    %21 = vector.load %arg5[%c0_13, %c0_14] : memref<256x128xbf16, #tpu.memory_space<vmem>>, vector<256x128xbf16>
    %cst_15 = arith.constant dense<0.000000e+00> : vector<8x128xf32>
    %22 = tpu.matmul %18, %21, %cst_15 {dimension_numbers = #tpu.dot_dimension_numbers<[1], [0], [0], [1], [0, 0, 1, 1], [], []>} : vector<8x256xbf16>, vector<256x128xbf16>, vector<8x128xf32> -> vector<8x128xf32>
    %23 = arith.addf %20, %22 : vector<8x128xf32>
    %c0_16 = arith.constant 0 : index
    %c0_17 = arith.constant 0 : index
    %24 = vector.load %arg9[%c0_16, %c0_17] : memref<8x128xf32, #tpu.memory_space<vmem>>, vector<8x128xf32>
    tpu.vector_store %arg9[%c0_16, %c0_17], %23 {strides = array<i32>} : memref<8x128xf32, #tpu.memory_space<vmem>>, vector<8x128xf32>,
    %c1_i32 = arith.constant 1 : i32
    %25 = arith.cmpi eq, %arg1, %c1_i32 : i32
    %26 = arith.extui %25 : i1 to i32
    %c0_i32_18 = arith.constant 0 : i32
    %27 = arith.cmpi ne, %26, %c0_i32_18 : i32
    scf.if %27 {
      %c0_19 = arith.constant 0 : index
      %c0_20 = arith.constant 0 : index
      %28 = vector.load %arg9[%c0_19, %c0_20] : memref<8x128xf32, #tpu.memory_space<vmem>>, vector<8x128xf32>
      %c0_21 = arith.constant 0 : index
      %c0_22 = arith.constant 0 : index
      %29 = vector.load %arg6[%c0_21, %c0_22] : memref<1x128xf32, #tpu.memory_space<vmem>>, vector<1x128xf32>
      %30 = vector.broadcast %29 : vector<1x128xf32> to vector<8x128xf32>
      %31 = arith.addf %28, %30 : vector<8x128xf32>
      %c0_23 = arith.constant 0 : index
      %c0_24 = arith.constant 0 : index
      %32 = vector.load %arg7[%c0_23, %c0_24] : memref<8x128xf32, #tpu.memory_space<vmem>>, vector<8x128xf32>
      tpu.vector_store %arg7[%c0_23, %c0_24], %31 {strides = array<i32>} : memref<8x128xf32, #tpu.memory_space<vmem>>, vector<8x128xf32>,
    } else {
    }
    return
  }
  func.func @transform_0(%arg0: i32, %arg1: i32) -> (i32, i32) {
    %c0_i32 = arith.constant 0 : i32
    %c0_i32_0 = arith.constant 0 : i32
    return %arg0, %c0_i32 : i32, i32
  }
  func.func @transform_1(%arg0: i32, %arg1: i32) -> (i32, i32) {
    %c0_i32 = arith.constant 0 : i32
    %c0_i32_0 = arith.constant 0 : i32
    return %c0_i32, %arg1 : i32, i32
  }
  func.func @transform_2(%arg0: i32, %arg1: i32) -> (i32, i32) {
    %c0_i32 = arith.constant 0 : i32
    %c0_i32_0 = arith.constant 0 : i32
    return %c0_i32, %arg1 : i32, i32
  }
  func.func @transform_3(%arg0: i32, %arg1: i32) -> (i32, i32) {
    %c0_i32 = arith.constant 0 : i32
    %c0_i32_0 = arith.constant 0 : i32
    return %arg1, %c0_i32 : i32, i32
  }
  func.func @transform_4(%arg0: i32, %arg1: i32) -> (i32, i32) {
    %c0_i32 = arith.constant 0 : i32
    %c0_i32_0 = arith.constant 0 : i32
    %c0_i32_1 = arith.constant 0 : i32
    return %c0_i32, %c0_i32_0 : i32, i32
  }
  func.func @transform_5(%arg0: i32, %arg1: i32) -> (i32, i32) {
    %c0_i32 = arith.constant 0 : i32
    %c0_i32_0 = arith.constant 0 : i32
    return %arg0, %c0_i32 : i32, i32
  }
  func.func @transform_6(%arg0: i32, %arg1: i32) -> (i32, i32) {
    %c0_i32 = arith.constant 0 : i32
    return %arg0, %arg1 : i32, i32
  }
}

</mosaic_0001>

<llo_original>
// kernel: tpu_custom_call.1
$region0: #{tpu_custom_call.1}
  #allocation0 [shape = 'u32[]', space=smem, size = 0x4, offset = 0x4, fixed_abs, tag = 'smem constant byte address 0x4 - core index']
  #allocation1 [shape = 'u32[144,128]{1,0:T(1,128)}', space=vmem, size = 0x12000, scoped, tag = 'internal scratch']
  #allocation2 [shape = 'f32[8,128]{1,0:T(8,128)}', space=vmem, size = 0x1000, scoped, tag = 'scratch operand']
  %s0 = inlined_call_operand.hbm [shape: f32[16,128], index: 0, kind: input, shape index: {}]
  %s1 = inlined_call_operand.hbm [shape: bf16[128,512], index: 1, kind: input, shape index: {}]
  %s2 = inlined_call_operand.vmem [shape: f32[1,512], index: 2, kind: input, shape index: {}]
  %s3 = inlined_call_operand.hbm [shape: bf16[512,128], index: 3, kind: input, shape index: {}]
  %s4 = inlined_call_operand.vmem [shape: f32[1,128], index: 4, kind: input, shape index: {}]
  %s5 = inlined_call_operand.hbm [shape: f32[16,128], index: 5, kind: output, shape index: {0}]
  %s6 = inlined_call_operand.hbm [shape: f32[16,512], index: 6, kind: output, shape index: {1}]
  %7 = xla_tuple %s5, %s6
  %s8 = sld [smem:[#allocation0]]
  $region81: #{tpu_custom_call.1} parent=0
    _
  %s10 = ssub.s32 1, %s8
  %s11 = scalar_select 0, %s10, %s8
  $region1: #{tpu_custom_call.1} parent=0
    #allocation3 [shape = 'u8[8192]{0}', space=vmem, size = 0x2000, scoped, tag = 'input window, operand 0']
    #allocation4 [shape = 's32[2]{0}', space=sflag, size = 0x8, scoped, tag = 'scoped memory for tpu_custom_call.1']
    #allocation5 [shape = 's32[2]{0}', space=sflag, size = 0x8, scoped, tag = 'scoped memory for tpu_custom_call.1']
    #allocation6 [shape = 'u8[131072]{0}', space=vmem, size = 0x20000, scoped, tag = 'input window, operand 1']
    #allocation7 [shape = 's32[2]{0}', space=sflag, size = 0x8, scoped, tag = 'scoped memory for tpu_custom_call.1']
    #allocation8 [shape = 'u8[131072]{0}', space=vmem, size = 0x20000, scoped, tag = 'input window, operand 3']
    #allocation9 [shape = 'u8[8192]{0}', space=vmem, size = 0x2000, scoped, tag = 'output window, operand 0']
    #allocation10 [shape = 'u8[16384]{0}', space=vmem, size = 0x4000, scoped, tag = 'output window, operand 1']
    #allocation11 [shape = 's32[2]{0}', space=sflag, size = 0x8, scoped, tag = 'scoped memory for tpu_custom_call.1']
    %12 = vsyncpa [#allocation4], 0
    %s13 = scalar_lea.sflag [#allocation4], 1
    %14 = vsyncpa %s13, 0
    %15 = vsyncpa [#allocation7], 0
    %s16 = scalar_lea.sflag [#allocation7], 1
    %17 = vsyncpa %s16, 0
    %18 = vsyncpa [#allocation5], 0
    %s19 = scalar_lea.sflag [#allocation5], 1
    %20 = vsyncpa %s19, 0
    %21 = vsyncpa [#allocation11], 0
    %s22 = scalar_lea.sflag [#allocation11], 1
    %23 = vsyncpa %s22, 0
    loop: start=0, step=1, limit=6
    $region2: #{tpu_custom_call.1} parent=1 // loop_pre_header
      _
    $region3: #{tpu_custom_call.1} parent=1 // loop_header
      %s25 = sphi 0, %s29
      %p26 = scmp.ge.s32.totalorder %s25, 6
      %s32 = sphi 0, %s44
      %s33 = sphi 0, %s40
      %s34 = sphi 0, %s32
      %s35 = sphi 0, %s33
      %s36 = sphi 0, %s34
      %s37 = sphi 0, %s35
      %s47 = sphi 0, %s49
      %s50 = sphi 0, %s47
      %s51 = sphi 0, %s50
      %s67 = sphi 0, %s51
      %s73 = sphi 0, %s75
      %s76 = sphi 0, %s73
      %s77 = sphi 0, %s76
      %s93 = sphi 0, %s77
      %s99 = sphi 0, %s101
      %s102 = sphi 0, %s99
      %s103 = sphi 0, %s102
      %s119 = sphi 0, %s103
      %s125 = sphi 0, %s127
      %s128 = sphi 0, %s125
      %s129 = sphi 0, %s128
      %s145 = sphi 0, %s129
      %s149 = sphi 0, %s149
      %s151 = sphi 0, %s149
      %s152 = sphi 0, %s151
      %s166 = sphi 0, %s152
      %s172 = sphi 0, %s174
      %s175 = sphi 0, %s172
      %s176 = sphi 0, %s175
      %s192 = sphi 0, %s176
      %s200 = sphi 0, %s202
      %s203 = sphi 0, %s200
      %s204 = sphi 0, %s203
      %s220 = sphi 0, %s204
    $region4: #{tpu_custom_call.1} parent=1 // loop_header_branch
      %28 = sbr.rel (%p26) target = $region8
    $region5: #{tpu_custom_call.1} parent=1 // loop_body
      %s30 = ssub.s32 %s25, 1
      %s31 = ssub.s32 %s25, 2
      %s38 = sadd.s32 1, %s33
      %p39 = scmp.ge.s32.totalorder %s38, 2
      %s40 = scalar_select %p39, 0, %s38
      %s41 = sadd.s32 1, %s32
      %s42 = scalar_select %p39, %s41, %s32
      %p43 = scmp.ge.s32.totalorder %s42, 2
      %s44 = scalar_select %p43, 0, %s42
      %s45 = ssub.s32 %s32, %s44
      %p46 = scmp.eq.s32.totalorder %s45, 0
      %s48 = sadd.s32 %s47, 1
      %s49 = scalar_select %p46, %s47, %s48
      %p52 = pneg %p46
      %p53 = scmp.eq.s32.totalorder %s25, 3
      %p54 = por %p52, %p53
      %p55 = scmp.ne.s32.totalorder %s47, %s50
      %p56 = scmp.eq.s32.totalorder %s25, 0
      %p57 = por %p55, %p56
      %p58 = scmp.ne.s32.totalorder %s47, %s50
      %p59 = scmp.eq.s32.totalorder %s30, 3
      %p60 = por %p58, %p59
      %p61 = scmp.ne.s32.totalorder %s50, %s51
      %p62 = scmp.eq.s32.totalorder %s30, 0
      %p63 = por %p61, %p62
      %p64 = scmp.ne.s32.totalorder %s50, %s51
      %p65 = scmp.eq.s32.totalorder %s31, 3
      %p66 = por %p64, %p65
      %p68 = scmp.ne.s32.totalorder %s51, %s67
      %p69 = scmp.eq.s32.totalorder %s31, 0
      %p70 = por %p68, %p69
      %s71 = ssub.s32 %s33, %s40
      %p72 = scmp.eq.s32.totalorder %s71, 0
      %s74 = sadd.s32 %s73, 1
      %s75 = scalar_select %p72, %s73, %s74
      %p78 = pneg %p72
      %p79 = scmp.eq.s32.totalorder %s25, 3
      %p80 = por %p78, %p79
      %p81 = scmp.ne.s32.totalorder %s73, %s76
      %p82 = scmp.eq.s32.totalorder %s25, 0
      %p83 = por %p81, %p82
      %p84 = scmp.ne.s32.totalorder %s73, %s76
      %p85 = scmp.eq.s32.totalorder %s30, 3
      %p86 = por %p84, %p85
      %p87 = scmp.ne.s32.totalorder %s76, %s77
      %p88 = scmp.eq.s32.totalorder %s30, 0
      %p89 = por %p87, %p88
      %p90 = scmp.ne.s32.totalorder %s76, %s77
      %p91 = scmp.eq.s32.totalorder %s31, 3
      %p92 = por %p90, %p91
      %p94 = scmp.ne.s32.totalorder %s77, %s93
      %p95 = scmp.eq.s32.totalorder %s31, 0
      %p96 = por %p94, %p95
      %s97 = ssub.s32 %s33, %s40
      %p98 = scmp.eq.s32.totalorder %s97, 0
      %s100 = sadd.s32 %s99, 1
      %s101 = scalar_select %p98, %s99, %s100
      %p104 = pneg %p98
      %p105 = scmp.eq.s32.totalorder %s25, 3
      %p106 = por %p104, %p105
      %p107 = scmp.ne.s32.totalorder %s99, %s102
      %p108 = scmp.eq.s32.totalorder %s25, 0
      %p109 = por %p107, %p108
      %p110 = scmp.ne.s32.totalorder %s99, %s102
      %p111 = scmp.eq.s32.totalorder %s30, 3
      %p112 = por %p110, %p111
      %p113 = scmp.ne.s32.totalorder %s102, %s103
      %p114 = scmp.eq.s32.totalorder %s30, 0
      %p115 = por %p113, %p114
      %p116 = scmp.ne.s32.totalorder %s102, %s103
      %p117 = scmp.eq.s32.totalorder %s31, 3
      %p118 = por %p116, %p117
      %p120 = scmp.ne.s32.totalorder %s103, %s119
      %p121 = scmp.eq.s32.totalorder %s31, 0
      %p122 = por %p120, %p121
      %s123 = ssub.s32 %s33, %s40
      %p124 = scmp.eq.s32.totalorder %s123, 0
      %s126 = sadd.s32 %s125, 1
      %s127 = scalar_select %p124, %s125, %s126
      %p130 = pneg %p124
      %p131 = scmp.eq.s32.totalorder %s25, 3
      %p132 = por %p130, %p131
      %p133 = scmp.ne.s32.totalorder %s125, %s128
      %p134 = scmp.eq.s32.totalorder %s25, 0
      %p135 = por %p133, %p134
      %p136 = scmp.ne.s32.totalorder %s125, %s128
      %p137 = scmp.eq.s32.totalorder %s30, 3
      %p138 = por %p136, %p137
      %p139 = scmp.ne.s32.totalorder %s128, %s129
      %p140 = scmp.eq.s32.totalorder %s30, 0
      %p141 = por %p139, %p140
      %p142 = scmp.ne.s32.totalorder %s128, %s129
      %p143 = scmp.eq.s32.totalorder %s31, 3
      %p144 = por %p142, %p143
      %p146 = scmp.ne.s32.totalorder %s129, %s145
      %p147 = scmp.eq.s32.totalorder %s31, 0
      %p148 = por %p146, %p147
      %s150 = sadd.s32 %s149, 1
      %p153 = scmp.eq.s32.totalorder %s25, 3
      %p154 = scmp.ne.s32.totalorder %s149, %s151
      %p155 = scmp.eq.s32.totalorder %s25, 0
      %p156 = por %p154, %p155
      %p157 = scmp.ne.s32.totalorder %s149, %s151
      %p158 = scmp.eq.s32.totalorder %s30, 3
      %p159 = por %p157, %p158
      %p160 = scmp.ne.s32.totalorder %s151, %s152
      %p161 = scmp.eq.s32.totalorder %s30, 0
      %p162 = por %p160, %p161
      %p163 = scmp.ne.s32.totalorder %s151, %s152
      %p164 = scmp.eq.s32.totalorder %s31, 3
      %p165 = por %p163, %p164
      %p167 = scmp.ne.s32.totalorder %s152, %s166
      %p168 = scmp.eq.s32.totalorder %s31, 0
      %p169 = por %p167, %p168
      %s170 = ssub.s32 %s32, %s44
      %p171 = scmp.eq.s32.totalorder %s170, 0
      %s173 = sadd.s32 %s172, 1
      %s174 = scalar_select %p171, %s172, %s173
      %p177 = pneg %p171
      %p178 = scmp.eq.s32.totalorder %s25, 3
      %p179 = por %p177, %p178
      %p180 = scmp.ne.s32.totalorder %s172, %s175
      %p181 = scmp.eq.s32.totalorder %s25, 0
      %p182 = por %p180, %p181
      %p183 = scmp.ne.s32.totalorder %s172, %s175
      %p184 = scmp.eq.s32.totalorder %s30, 3
      %p185 = por %p183, %p184
      %p186 = scmp.ne.s32.totalorder %s175, %s176
      %p187 = scmp.eq.s32.totalorder %s30, 0
      %p188 = por %p186, %p187
      %p189 = scmp.ne.s32.totalorder %s175, %s176
      %p190 = scmp.eq.s32.totalorder %s31, 3
      %p191 = por %p189, %p190
      %p193 = scmp.ne.s32.totalorder %s176, %s192
      %p194 = scmp.eq.s32.totalorder %s31, 0
      %p195 = por %p193, %p194
      %s196 = ssub.s32 %s32, %s44
      %s197 = ssub.s32 %s33, %s40
      %s198 = sor.u32 %s196, %s197
      %p199 = scmp.eq.s32.totalorder %s198, 0
      %s201 = sadd.s32 %s200, 1
      %s202 = scalar_select %p199, %s200, %s201
      %p205 = pneg %p199
      %p206 = scmp.eq.s32.totalorder %s25, 3
      %p207 = por %p205, %p206
      %p208 = scmp.ne.s32.totalorder %s200, %s203
      %p209 = scmp.eq.s32.totalorder %s25, 0
      %p210 = por %p208, %p209
      %p211 = scmp.ne.s32.totalorder %s200, %s203
      %p212 = scmp.eq.s32.totalorder %s30, 3
      %p213 = por %p211, %p212
      %p214 = scmp.ne.s32.totalorder %s203, %s204
      %p215 = scmp.eq.s32.totalorder %s30, 0
      %p216 = por %p214, %p215
      %p217 = scmp.ne.s32.totalorder %s203, %s204
      %p218 = scmp.eq.s32.totalorder %s31, 3
      %p219 = por %p217, %p218
      %p221 = scmp.ne.s32.totalorder %s204, %s220
      %p222 = scmp.eq.s32.totalorder %s31, 0
      %p223 = por %p221, %p222
      %p224 = scmp.le.s32.totalorder 1, %s25
      %p225 = scmp.lt.s32.totalorder %s25, 5
      %p226 = pnand %p224, %p225
      %p227 = pneg %p226
      // Predicated region
      $region9: #{tpu_custom_call.1} parent=5 // pred_check
        _
      $region10: #{tpu_custom_call.1} parent=5 // pred_check_branch
        %229 = sbr.rel (%p226) target = $region12
      $region11: #{tpu_custom_call.1} parent=5 // pred_region
        %s230 = ssub.s32 %s25, 1
        // Predicated region
        $region13: #{tpu_custom_call.1} parent=11 // pred_check
          %p231 = pneg %p162
        $region14: #{tpu_custom_call.1} parent=11 // pred_check_branch
          %233 = sbr.rel (%p231) target = $region16
        $region15: #{tpu_custom_call.1} parent=11 // pred_region
          _
        $region16: #{tpu_custom_call.1} parent=11 // pred_fallthru
          _
      $region12: #{tpu_custom_call.1} parent=5 // pred_fallthru
        _
      %p234 = scmp.lt.s32.totalorder %s25, 4
      // Predicated region
      $region17: #{tpu_custom_call.1} parent=5 // pred_check
        %p235 = pneg %p234
      $region18: #{tpu_custom_call.1} parent=5 // pred_check_branch
        %237 = sbr.rel (%p235) target = $region20
      $region19: #{tpu_custom_call.1} parent=5 // pred_region
        // Predicated region
        $region21: #{tpu_custom_call.1} parent=19 // pred_check
          %p238 = pneg %p57
        $region22: #{tpu_custom_call.1} parent=19 // pred_check_branch
          %240 = sbr.rel (%p238) target = $region24
        $region23: #{tpu_custom_call.1} parent=19 // pred_region
          %s241 = sand.u32 %s47, 1
          %s242 = scalar_lea.sflag [#allocation4], %s241
          %s243 = sand.u32 %s47, 1
          %s244 = smul.addr %s243, 8
          %s245 = scalar_lea.vmem [#allocation3], %s244
          %s247 = ssub.s32 128, 128
          %248 = vsyncadd %s242, %s247
          %s249 = smul.addr %s32, 128
          %s250 = scalar_lea.hbm %s0, %s249
          %s252 = sshll.u32 %s245, 4
          %s253 = int_to_ptr.vmem [resolvable:$true] %s252
          %255 = dma.hbm_to_vmem [thread:$0]  %s250, 128, %s253, %s242
        $region24: #{tpu_custom_call.1} parent=19 // pred_fallthru
          _
        // Predicated region
        $region25: #{tpu_custom_call.1} parent=19 // pred_check
          %p256 = pneg %p83
        $region26: #{tpu_custom_call.1} parent=19 // pred_check_branch
          %258 = sbr.rel (%p256) target = $region28
        $region27: #{tpu_custom_call.1} parent=19 // pred_region
          %s259 = sand.u32 %s25, 1
          %s260 = scalar_lea.sflag [#allocation7], %s259
          %s261 = sand.u32 %s73, 1
          %s262 = smul.addr %s261, 128
          %s263 = scalar_lea.vmem [#allocation6], %s262
          %s264 = smul.u32 2, %s33
          %s266 = ssub.s32 2048, 2048
          %267 = vsyncadd %s260, %s266
          %s268 = smul.addr %s264, 64
          %s269 = scalar_lea.hbm %s1, %s268
          %s270 = sshll.u32 %s263, 4
          %s271 = int_to_ptr.vmem [resolvable:$true] %s270
          %276 = dma.hbm_to_vmem [thread:$0]  %s269, 2048, %s271, %s260, 256, 128, 8
        $region28: #{tpu_custom_call.1} parent=19 // pred_fallthru
          _
        // Predicated region
        $region29: #{tpu_custom_call.1} parent=19 // pred_check
          %p277 = pneg %p109
        $region30: #{tpu_custom_call.1} parent=19 // pred_check_branch
          %279 = sbr.rel (%p277) target = $region32
        $region31: #{tpu_custom_call.1} parent=19 // pred_region
          %s280 = smul.u32 2, %s33
          %p281 = scmp.lt.s32.totalorder %s280, 3
          %s282 = scalar_select %p281, %s280, 3
          %s283 = scalar_lea.vmem %s2, %s282
          %s284 = smul.u32 2, %s33
        $region32: #{tpu_custom_call.1} parent=19 // pred_fallthru
          _
        // Predicated region
        $region33: #{tpu_custom_call.1} parent=19 // pred_check
          %p285 = pneg %p135
        $region34: #{tpu_custom_call.1} parent=19 // pred_check_branch
          %287 = sbr.rel (%p285) target = $region36
        $region35: #{tpu_custom_call.1} parent=19 // pred_region
          %s288 = sand.u32 %s25, 1
          %s289 = scalar_lea.sflag [#allocation7], %s288
          %s290 = sand.u32 %s125, 1
          %s291 = smul.addr %s290, 128
          %s292 = scalar_lea.vmem [#allocation8], %s291
          %s293 = smul.u32 32, %s33
          %s295 = ssub.s32 2048, 2048
          %296 = vsyncadd %s289, %s295
          %s297 = smul.addr %s293, 64
          %s298 = scalar_lea.hbm %s3, %s297
          %s299 = sshll.u32 %s292, 4
          %s300 = int_to_ptr.vmem [resolvable:$true] %s299
          %305 = dma.hbm_to_vmem [thread:$0]  %s298, 2048, %s300, %s289, 64, 64, 4
        $region36: #{tpu_custom_call.1} parent=19 // pred_fallthru
          _
      $region20: #{tpu_custom_call.1} parent=5 // pred_fallthru
        _
      %p306 = scmp.le.s32.totalorder 1, %s25
      %p307 = scmp.lt.s32.totalorder %s25, 5
      %p308 = pnand %p306, %p307
      %p309 = pneg %p308
      // Predicated region
      $region37: #{tpu_custom_call.1} parent=5 // pred_check
        _
      $region38: #{tpu_custom_call.1} parent=5 // pred_check_branch
        %311 = sbr.rel (%p308) target = $region40
      $region39: #{tpu_custom_call.1} parent=5 // pred_region
        %s312 = ssub.s32 %s25, 1
        %s313 = sand.u32 %s50, 1
        %s314 = scalar_lea.sflag [#allocation4], %s313
        %s315 = sand.u32 %s50, 1
        %s316 = smul.addr %s315, 8
        %s317 = scalar_lea.vmem [#allocation3], %s316
        // Predicated region
        $region41: #{tpu_custom_call.1} parent=39 // pred_check
          %p318 = pneg %p63
        $region42: #{tpu_custom_call.1} parent=39 // pred_check_branch
          %320 = sbr.rel (%p318) target = $region44
        $region43: #{tpu_custom_call.1} parent=39 // pred_region
          %321 = dma.done %s314, 128
        $region44: #{tpu_custom_call.1} parent=39 // pred_fallthru
          _
        %s322 = sand.u32 %s30, 1
        %s323 = scalar_lea.sflag [#allocation7], %s322
        %s324 = sand.u32 %s76, 1
        %s325 = smul.addr %s324, 128
        %s326 = scalar_lea.vmem [#allocation6], %s325
        // Predicated region
        $region45: #{tpu_custom_call.1} parent=39 // pred_check
          %p327 = pneg %p89
        $region46: #{tpu_custom_call.1} parent=39 // pred_check_branch
          %329 = sbr.rel (%p327) target = $region48
        $region47: #{tpu_custom_call.1} parent=39 // pred_region
          %330 = dma.done %s323, 2048
        $region48: #{tpu_custom_call.1} parent=39 // pred_fallthru
          _
        %s331 = sand.u32 %s30, 1
        %s332 = scalar_lea.sflag [#allocation7], %s331
        %s333 = sand.u32 %s128, 1
        %s334 = smul.addr %s333, 128
        %s335 = scalar_lea.vmem [#allocation8], %s334
        // Predicated region
        $region49: #{tpu_custom_call.1} parent=39 // pred_check
          %p336 = pneg %p141
        $region50: #{tpu_custom_call.1} parent=39 // pred_check_branch
          %338 = sbr.rel (%p336) target = $region52
        $region51: #{tpu_custom_call.1} parent=39 // pred_region
          %339 = dma.done %s332, 2048
        $region52: #{tpu_custom_call.1} parent=39 // pred_fallthru
          _
        %s340 = sand.u32 %s50, 1
        %s341 = scalar_lea.sflag [#allocation4], %s340
        %s342 = sand.u32 %s50, 1
        %s343 = smul.addr %s342, 8
        %s344 = scalar_lea.vmem [#allocation3], %s343
        %p345 = pneg %p63
        %p346 = pneg %p60
        %s347 = sand.u32 %s30, 1
        %s348 = scalar_lea.sflag [#allocation7], %s347
        %s349 = sand.u32 %s76, 1
        %s350 = smul.addr %s349, 128
        %s351 = scalar_lea.vmem [#allocation6], %s350
        %p352 = pneg %p89
        %p353 = pneg %p86
        %s354 = smul.u32 2, %s35
        %p355 = scmp.lt.s32.totalorder %s354, 3
        %s356 = scalar_select %p355, %s354, 3
        %s357 = scalar_lea.vmem %s2, %s356
        %p358 = pneg %p115
        %p359 = pneg %p112
        %s360 = sand.u32 %s30, 1
        %s361 = scalar_lea.sflag [#allocation7], %s360
        %s362 = sand.u32 %s128, 1
        %s363 = smul.addr %s362, 128
        %s364 = scalar_lea.vmem [#allocation8], %s363
        %p365 = pneg %p141
        %p366 = pneg %p138
        %p367 = pneg %p162
        %p368 = pneg %p159
        %p369 = pneg %p188
        %p370 = pneg %p185
        %s371 = sand.u32 %s175, 1
        %s372 = scalar_lea.sflag [#allocation5], %s371
        %s373 = sand.u32 %s175, 1
        %s374 = smul.addr %s373, 8
        %s375 = scalar_lea.vmem [#allocation9], %s374
        %p376 = pneg %p216
        %p377 = pneg %p213
        %s378 = sand.u32 %s203, 1
        %s379 = scalar_lea.sflag [#allocation11], %s378
        %s380 = sand.u32 %s203, 1
        %s381 = smul.addr %s380, 16
        %s382 = scalar_lea.vmem [#allocation10], %s381
        %s383 = smul.u32 2, %s35
        %s384 = smul.u32 2, %s35
        %p385 = scmp.lt.s32.totalorder %s384, 3
        %s386 = scalar_select %p385, %s384, 3
        %s387 = scalar_lea.vmem %s2, %s386
        %s388 = smul.u32 2, %s35
        %s389 = smul.u32 32, %s35
        %s390 = smul.u32 2, %s35
        %p392 = scmp.eq.s32.totalorder %s35, 0
        // Predicated region
        $region53: #{tpu_custom_call.1} parent=39 // pred_check
          %p393 = pneg %p392
        $region54: #{tpu_custom_call.1} parent=39 // pred_check_branch
          %395 = sbr.rel (%p393) target = $region56
        $region55: #{tpu_custom_call.1} parent=39 // pred_region
          %396 = vst [vmem:[#allocation2] sm:$0xff] 0.0
        $region56: #{tpu_custom_call.1} parent=39 // pred_fallthru
          _
        %v397 = vld [vmem:[%s317] sm:$0xff]
        %v398 = vpack.c.bf16 %v397, %v397
        %v399 = vld [vmem:[%s326] sm:$0xff]
        %v400 = vld [vmem:[%s326 + $0x8] sm:$0xff]
        %v401 = vld [vmem:[%s326 + $0x10] sm:$0xff]
        %v402 = vld [vmem:[%s326 + $0x18] sm:$0xff]
        %v403 = vld [vmem:[%s326 + $0x20] sm:$0xff]
        %v404 = vld [vmem:[%s326 + $0x28] sm:$0xff]
        %v405 = vld [vmem:[%s326 + $0x30] sm:$0xff]
        %v406 = vld [vmem:[%s326 + $0x38] sm:$0xff]
        %v407 = vld [vmem:[%s326 + $0x40] sm:$0xff]
        %v408 = vld [vmem:[%s326 + $0x48] sm:$0xff]
        %v409 = vld [vmem:[%s326 + $0x50] sm:$0xff]
        %v410 = vld [vmem:[%s326 + $0x58] sm:$0xff]
        %v411 = vld [vmem:[%s326 + $0x60] sm:$0xff]
        %v412 = vld [vmem:[%s326 + $0x68] sm:$0xff]
        %v413 = vld [vmem:[%s326 + $0x70] sm:$0xff]
        %v414 = vld [vmem:[%s326 + $0x78] sm:$0xff]
        %v415 = vld [vmem:[%s387] sm:$0x3]
        %v417 = vlaneseq
        %v418 = vshrl.u32 %v417, 7
        %v419 = vsub.s32 0, %v418
        %v420 = vrot.slane %v415, %v419
        %v421 = vlaneseq
        %v422 = vshrl.u32 %v421, 7
        %v423 = vsub.s32 1, %v422
        %v424 = vrot.slane %v415, %v423
        %v443 = vunpack.c.l.b16 %v399
        %v444 = vunpack.c.h.b16 %v399
        %v445 = vunpack.c.l.b16 %v400
        %v446 = vunpack.c.h.b16 %v400
        %v447 = vunpack.c.l.b16 %v401
        %v448 = vunpack.c.h.b16 %v401
        %v449 = vunpack.c.l.b16 %v402
        %v450 = vunpack.c.h.b16 %v402
        %v451 = vunpack.c.l.b16 %v403
        %v452 = vunpack.c.h.b16 %v403
        %v453 = vunpack.c.l.b16 %v404
        %v454 = vunpack.c.h.b16 %v404
        %v455 = vunpack.c.l.b16 %v405
        %v456 = vunpack.c.h.b16 %v405
        %v457 = vunpack.c.l.b16 %v406
        %v458 = vunpack.c.h.b16 %v406
        %v459 = vunpack.c.l.b16 %v407
        %v460 = vunpack.c.h.b16 %v407
        %v461 = vunpack.c.l.b16 %v408
        %v462 = vunpack.c.h.b16 %v408
        %v463 = vunpack.c.l.b16 %v409
        %v464 = vunpack.c.h.b16 %v409
        %v465 = vunpack.c.l.b16 %v410
        %v466 = vunpack.c.h.b16 %v410
        %v467 = vunpack.c.l.b16 %v411
        %v468 = vunpack.c.h.b16 %v411
        %v469 = vunpack.c.l.b16 %v412
        %v470 = vunpack.c.h.b16 %v412
        %v471 = vunpack.c.l.b16 %v413
        %v472 = vunpack.c.h.b16 %v413
        %v473 = vunpack.c.l.b16 %v414
        %v474 = vunpack.c.h.b16 %v414
        %v475 = vpack.c.b16 %v445, %v443
        %v476 = vpack.c.b16 %v446, %v444
        %v477 = vpack.c.b16 %v449, %v447
        %v478 = vpack.c.b16 %v450, %v448
        %v479 = vpack.c.b16 %v453, %v451
        %v480 = vpack.c.b16 %v454, %v452
        %v481 = vpack.c.b16 %v457, %v455
        %v482 = vpack.c.b16 %v458, %v456
        %v483 = vpack.c.b16 %v461, %v459
        %v484 = vpack.c.b16 %v462, %v460
        %v485 = vpack.c.b16 %v465, %v463
        %v486 = vpack.c.b16 %v466, %v464
        %v487 = vpack.c.b16 %v469, %v467
        %v488 = vpack.c.b16 %v470, %v468
        %v489 = vpack.c.b16 %v473, %v471
        %v490 = vpack.c.b16 %v474, %v472
        %507 = vmatprep.subr.bf16.mxu0 %v476
        %508 = vmatpush1.bf16.msra.mxu0 %v475
        %509 = vmatprep.subr.bf16.mxu0 %v478
        %510 = vmatpush1.bf16.msra.mxu0 %v477
        %511 = vmatprep.subr.bf16.mxu0 %v480
        %512 = vmatpush1.bf16.msra.mxu0 %v479
        %513 = vmatprep.subr.bf16.mxu0 %v482
        %514 = vmatpush1.bf16.msra.mxu0 %v481
        %515 = vmatprep.subr.bf16.mxu0 %v484
        %516 = vmatpush1.bf16.msra.mxu0 %v483
        %517 = vmatprep.subr.bf16.mxu0 %v486
        %518 = vmatpush1.bf16.msra.mxu0 %v485
        %519 = vmatprep.subr.bf16.mxu0 %v488
        %520 = vmatpush1.bf16.msra.mxu0 %v487
        %521 = vmatprep.subr.bf16.mxu0 %v490
        %522 = vmatpush1.bf16.msra.mxu0 %v489
        %523 = vmatprep.subr.bf16.mxu0 0
        %524 = vmatpush1.bf16.msra.mxu0 0
        %525 = vmatprep.subr.bf16.mxu0 0
        %526 = vmatpush1.bf16.msra.mxu0 0
        %527 = vmatprep.subr.bf16.mxu0 0
        %528 = vmatpush1.bf16.msra.mxu0 0
        %529 = vmatprep.subr.bf16.mxu0 0
        %530 = vmatpush1.bf16.msra.mxu0 0
        %531 = vmatprep.subr.bf16.mxu0 0
        %532 = vmatpush1.bf16.msra.mxu0 0
        %533 = vmatprep.subr.bf16.mxu0 0
        %534 = vmatpush1.bf16.msra.mxu0 0
        %535 = vmatprep.subr.bf16.mxu0 0
        %536 = vmatpush1.bf16.msra.mxu0 0
        %537 = vmatprep.subr.bf16.mxu0 0
        %538 = vmatpush1.bf16.msra.mxu0 0
        %539 = vmatprep.mubr.bf16.mxu0 0
        %540 = vmatmul.mubr.bf16.gmra.mrb[0].mxu0 %v398
        %v541 = vpop.f32.mrb[0].mxu0
        %v542 = vadd.f32 %v420, %v541
        %v543 = vpop.f32.mrb[0].mxu0
        %v544 = vadd.f32 %v424, %v543
        %v545 = vpop.f32.mrb[0].mxu0
        %v546 = vpop.f32.mrb[0].mxu0
        %547 = vdwg.mxu0
        %v548 = vmul.f32 %v542, 0.5
        %v549 = vmul.f32 %v544, 0.5
        %v550 = vmul.f32 %v542, 0.70710677
        %v551 = vmul.f32 %v544, 0.70710677
        %v552 = verf.f32.pop %v550
        %v553 = verf.f32.pop %v551
        %v554 = vadd.f32 %v552, 1.0
        %v555 = vadd.f32 %v553, 1.0
        %v556 = vmul.f32 %v548, %v554
        %v557 = vmul.f32 %v549, %v555
        %v558 = vpack.c.bf16 %v556, %v556
        %v559 = vpack.c.bf16 %v557, %v557
        %560 = vst [vmem:[%s382] sm:$0xff] %v556
        %561 = vst [vmem:[%s382 + $0x8] sm:$0xff] %v557
        %v562 = vld [vmem:[#allocation2] sm:$0xff]
        %v563 = vld [vmem:[%s335] sm:$0xf]
        %v564 = vld [vmem:[%s335 + $0x4] sm:$0xf]
        %v565 = vld [vmem:[%s335 + $0x8] sm:$0xf]
        %v566 = vld [vmem:[%s335 + $0xc] sm:$0xf]
        %v567 = vld [vmem:[%s335 + $0x10] sm:$0xf]
        %v568 = vld [vmem:[%s335 + $0x14] sm:$0xf]
        %v569 = vld [vmem:[%s335 + $0x18] sm:$0xf]
        %v570 = vld [vmem:[%s335 + $0x1c] sm:$0xf]
        %v571 = vld [vmem:[%s335 + $0x20] sm:$0xf]
        %v572 = vld [vmem:[%s335 + $0x24] sm:$0xf]
        %v573 = vld [vmem:[%s335 + $0x28] sm:$0xf]
        %v574 = vld [vmem:[%s335 + $0x2c] sm:$0xf]
        %v575 = vld [vmem:[%s335 + $0x30] sm:$0xf]
        %v576 = vld [vmem:[%s335 + $0x34] sm:$0xf]
        %v577 = vld [vmem:[%s335 + $0x38] sm:$0xf]
        %v578 = vld [vmem:[%s335 + $0x3c] sm:$0xf]
        %v579 = vld [vmem:[%s335 + $0x40] sm:$0xf]
        %v580 = vld [vmem:[%s335 + $0x44] sm:$0xf]
        %v581 = vld [vmem:[%s335 + $0x48] sm:$0xf]
        %v582 = vld [vmem:[%s335 + $0x4c] sm:$0xf]
        %v583 = vld [vmem:[%s335 + $0x50] sm:$0xf]
        %v584 = vld [vmem:[%s335 + $0x54] sm:$0xf]
        %v585 = vld [vmem:[%s335 + $0x58] sm:$0xf]
        %v586 = vld [vmem:[%s335 + $0x5c] sm:$0xf]
        %v587 = vld [vmem:[%s335 + $0x60] sm:$0xf]
        %v588 = vld [vmem:[%s335 + $0x64] sm:$0xf]
        %v589 = vld [vmem:[%s335 + $0x68] sm:$0xf]
        %v590 = vld [vmem:[%s335 + $0x6c] sm:$0xf]
        %v591 = vld [vmem:[%s335 + $0x70] sm:$0xf]
        %v592 = vld [vmem:[%s335 + $0x74] sm:$0xf]
        %v593 = vld [vmem:[%s335 + $0x78] sm:$0xf]
        %v594 = vld [vmem:[%s335 + $0x7c] sm:$0xf]
        %v627 = vunpack.c.l.b16 %v563
        %v628 = vunpack.c.l.b16 %v564
        %v629 = vunpack.c.l.b16 %v565
        %v630 = vunpack.c.l.b16 %v566
        %v631 = vunpack.c.l.b16 %v567
        %v632 = vunpack.c.l.b16 %v568
        %v633 = vunpack.c.l.b16 %v569
        %v634 = vunpack.c.l.b16 %v570
        %v635 = vunpack.c.l.b16 %v571
        %v636 = vunpack.c.l.b16 %v572
        %v637 = vunpack.c.l.b16 %v573
        %v638 = vunpack.c.l.b16 %v574
        %v639 = vunpack.c.l.b16 %v575
        %v640 = vunpack.c.l.b16 %v576
        %v641 = vunpack.c.l.b16 %v577
        %v642 = vunpack.c.l.b16 %v578
        %v643 = vunpack.c.l.b16 %v579
        %v644 = vunpack.c.l.b16 %v580
        %v645 = vunpack.c.l.b16 %v581
        %v646 = vunpack.c.l.b16 %v582
        %v647 = vunpack.c.l.b16 %v583
        %v648 = vunpack.c.l.b16 %v584
        %v649 = vunpack.c.l.b16 %v585
        %v650 = vunpack.c.l.b16 %v586
        %v651 = vunpack.c.l.b16 %v587
        %v652 = vunpack.c.l.b16 %v588
        %v653 = vunpack.c.l.b16 %v589
        %v654 = vunpack.c.l.b16 %v590
        %v655 = vunpack.c.l.b16 %v591
        %v656 = vunpack.c.l.b16 %v592
        %v657 = vunpack.c.l.b16 %v593
        %v658 = vunpack.c.l.b16 %v594
        %v659 = vpack.c.b16 %v628, %v627
        %v660 = vpack.c.b16 %v630, %v629
        %v661 = vpack.c.b16 %v632, %v631
        %v662 = vpack.c.b16 %v634, %v633
        %v663 = vpack.c.b16 %v636, %v635
        %v664 = vpack.c.b16 %v638, %v637
        %v665 = vpack.c.b16 %v640, %v639
        %v666 = vpack.c.b16 %v642, %v641
        %v667 = vpack.c.b16 %v644, %v643
        %v668 = vpack.c.b16 %v646, %v645
        %v669 = vpack.c.b16 %v648, %v647
        %v670 = vpack.c.b16 %v650, %v649
        %v671 = vpack.c.b16 %v652, %v651
        %v672 = vpack.c.b16 %v654, %v653
        %v673 = vpack.c.b16 %v656, %v655
        %v674 = vpack.c.b16 %v658, %v657
        %691 = vmatprep.subr.bf16.mxu0 0
        %692 = vmatpush1.bf16.msra.mxu0 %v659
        %693 = vmatprep.subr.bf16.mxu0 0
        %694 = vmatpush1.bf16.msra.mxu0 %v660
        %695 = vmatprep.subr.bf16.mxu0 0
        %696 = vmatpush1.bf16.msra.mxu0 %v661
        %697 = vmatprep.subr.bf16.mxu0 0
        %698 = vmatpush1.bf16.msra.mxu0 %v662
        %699 = vmatprep.subr.bf16.mxu0 0
        %700 = vmatpush1.bf16.msra.mxu0 %v663
        %701 = vmatprep.subr.bf16.mxu0 0
        %702 = vmatpush1.bf16.msra.mxu0 %v664
        %703 = vmatprep.subr.bf16.mxu0 0
        %704 = vmatpush1.bf16.msra.mxu0 %v665
        %705 = vmatprep.subr.bf16.mxu0 0
        %706 = vmatpush1.bf16.msra.mxu0 %v666
        %707 = vmatprep.subr.bf16.mxu0 0
        %708 = vmatpush1.bf16.msra.mxu0 %v667
        %709 = vmatprep.subr.bf16.mxu0 0
        %710 = vmatpush1.bf16.msra.mxu0 %v668
        %711 = vmatprep.subr.bf16.mxu0 0
        %712 = vmatpush1.bf16.msra.mxu0 %v669
        %713 = vmatprep.subr.bf16.mxu0 0
        %714 = vmatpush1.bf16.msra.mxu0 %v670
        %715 = vmatprep.subr.bf16.mxu0 0
        %716 = vmatpush1.bf16.msra.mxu0 %v671
        %717 = vmatprep.subr.bf16.mxu0 0
        %718 = vmatpush1.bf16.msra.mxu0 %v672
        %719 = vmatprep.subr.bf16.mxu0 0
        %720 = vmatpush1.bf16.msra.mxu0 %v673
        %721 = vmatprep.subr.bf16.mxu0 0
        %722 = vmatpush1.bf16.msra.mxu0 %v674
        %723 = vmatprep.mubr.bf16.mxu0 %v559
        %724 = vmatmul.mubr.bf16.gmra.mrb[0].mxu0 %v558
        %v725 = vpop.f32.mrb[0].mxu0
        %v726 = vadd.f32 0.0, %v725
        %v727 = vpop.f32.mrb[0].mxu0
        %v728 = vpop.f32.mrb[0].mxu0
        %v729 = vpop.f32.mrb[0].mxu0
        %730 = vdwg.mxu0
        %v731 = vadd.f32 %v562, %v726
        %732 = vst [vmem:[#allocation2] sm:$0xff] %v731
        %p733 = scmp.eq.s32.totalorder %s35, 1
        // Predicated region
        $region57: #{tpu_custom_call.1} parent=39 // pred_check
          %p734 = pneg %p733
        $region58: #{tpu_custom_call.1} parent=39 // pred_check_branch
          %736 = sbr.rel (%p734) target = $region60
        $region59: #{tpu_custom_call.1} parent=39 // pred_region
          %v737 = vld [vmem:[#allocation2] sm:$0xff]
          %v738 = vld [vmem:[%s4] sm:$0x1]
          %v740 = vlaneseq
          %v741 = vshrl.u32 %v740, 7
          %v742 = vsub.s32 0, %v741
          %v743 = vrot.slane %v738, %v742
          %v745 = vadd.f32 %v737, %v743
          %746 = vst [vmem:[%s375] sm:$0xff] %v745
        $region60: #{tpu_custom_call.1} parent=39 // pred_fallthru
          _
        %s747 = sand.u32 %s175, 1
        %s748 = scalar_lea.sflag [#allocation5], %s747
        %s749 = sand.u32 %s175, 1
        %s750 = smul.addr %s749, 8
        %s751 = scalar_lea.vmem [#allocation9], %s750
        %s752 = sand.u32 %s203, 1
        %s753 = scalar_lea.sflag [#allocation11], %s752
        %s754 = sand.u32 %s203, 1
        %s755 = smul.addr %s754, 16
        %s756 = scalar_lea.vmem [#allocation10], %s755
        // Predicated region
        $region61: #{tpu_custom_call.1} parent=39 // pred_check
          %p757 = pneg %p185
        $region62: #{tpu_custom_call.1} parent=39 // pred_check_branch
          %759 = sbr.rel (%p757) target = $region64
        $region63: #{tpu_custom_call.1} parent=39 // pred_region
          %s761 = ssub.s32 128, 128
          %762 = vsyncadd %s748, %s761
          %s763 = smul.addr %s34, 128
          %s764 = scalar_lea.hbm %s5, %s763
          %s766 = sshll.u32 %s751, 4
          %s767 = int_to_ptr.vmem [resolvable:$true] %s766
          %769 = dma.vmem_to_hbm [thread:$0]  %s767, 128, %s764, %s748
        $region64: #{tpu_custom_call.1} parent=39 // pred_fallthru
          _
        // Predicated region
        $region65: #{tpu_custom_call.1} parent=39 // pred_check
          %p770 = pneg %p213
        $region66: #{tpu_custom_call.1} parent=39 // pred_check_branch
          %772 = sbr.rel (%p770) target = $region68
        $region67: #{tpu_custom_call.1} parent=39 // pred_region
          %s773 = smul.u32 2, %s35
          %s775 = ssub.s32 256, 256
          %776 = vsyncadd %s753, %s775
          %s777 = smul.addr %s34, 4
          %s778 = sadd.s32 %s773, %s777
          %s779 = smul.addr %s778, 128
          %s780 = scalar_lea.hbm %s6, %s779
          %s782 = sshll.u32 %s756, 4
          %s783 = int_to_ptr.vmem [resolvable:$true] %s782
          %785 = dma.vmem_to_hbm [thread:$0]  %s783, 256, %s780, %s753
        $region68: #{tpu_custom_call.1} parent=39 // pred_fallthru
          _
      $region40: #{tpu_custom_call.1} parent=5 // pred_fallthru
        _
      %p786 = scmp.le.s32.totalorder 2, %s25
      // Predicated region
      $region69: #{tpu_custom_call.1} parent=5 // pred_check
        %p787 = pneg %p786
      $region70: #{tpu_custom_call.1} parent=5 // pred_check_branch
        %789 = sbr.rel (%p787) target = $region72
      $region71: #{tpu_custom_call.1} parent=5 // pred_region
        %s790 = ssub.s32 %s25, 2
        // Predicated region
        $region73: #{tpu_custom_call.1} parent=71 // pred_check
          %p791 = pneg %p191
        $region74: #{tpu_custom_call.1} parent=71 // pred_check_branch
          %793 = sbr.rel (%p791) target = $region76
        $region75: #{tpu_custom_call.1} parent=71 // pred_region
          %s794 = sand.u32 %s176, 1
          %s795 = scalar_lea.sflag [#allocation5], %s794
          %s796 = sand.u32 %s176, 1
          %s797 = smul.addr %s796, 8
          %s798 = scalar_lea.vmem [#allocation9], %s797
          %799 = dma.done %s795, 128
        $region76: #{tpu_custom_call.1} parent=71 // pred_fallthru
          _
        // Predicated region
        $region77: #{tpu_custom_call.1} parent=71 // pred_check
          %p800 = pneg %p219
        $region78: #{tpu_custom_call.1} parent=71 // pred_check_branch
          %802 = sbr.rel (%p800) target = $region80
        $region79: #{tpu_custom_call.1} parent=71 // pred_region
          %s803 = sand.u32 %s204, 1
          %s804 = scalar_lea.sflag [#allocation11], %s803
          %s805 = sand.u32 %s204, 1
          %s806 = smul.addr %s805, 16
          %s807 = scalar_lea.vmem [#allocation10], %s806
          %808 = dma.done %s804, 256
        $region80: #{tpu_custom_call.1} parent=71 // pred_fallthru
          _
      $region72: #{tpu_custom_call.1} parent=5 // pred_fallthru
        _
    $region6: #{tpu_custom_call.1} parent=1 // loop_footer
      %s29 = sadd.s32 1, %s25
    $region7: #{tpu_custom_call.1} parent=1 // loop_footer_branch
      %24 = sbr.rel target = $region3
    $region8: #{tpu_custom_call.1} parent=1 // loop_exit
      _
    %809 = vsyncpa [#allocation4], 1
    %s810 = scalar_lea.sflag [#allocation4], 1
    %811 = vsyncpa %s810, 1
    %812 = vsyncpa [#allocation7], 1
    %s813 = scalar_lea.sflag [#allocation7], 1
    %814 = vsyncpa %s813, 1
    %815 = vsyncpa [#allocation5], 1
    %s816 = scalar_lea.sflag [#allocation5], 1
    %817 = vsyncpa %s816, 1
    %818 = vsyncpa [#allocation11], 1
    %s819 = scalar_lea.sflag [#allocation11], 1
    %820 = vsyncpa %s819, 1

</llo_original>
